<compile_context>
chip_gen: v5e
topology: v5e:2x2
jax: 0.10.0
libtpu: 0.0.40
codegen_flags: <defaults>
</compile_context>

<pallas_src>
import functools

import jax
import jax.numpy as jnp
from jax import lax
from jax.experimental import pallas as pl
from jax.experimental.pallas import tpu as pltpu


def _round_up(x, m):
    return (x + m - 1) // m * m


def _wk_loss_kernel(yp_ref, yt_ref, out_ref,
                    a_acc, nom_acc, t0_acc, t1_acc, t2_acc, *,
                    num_classes, y_pow, epsilon, batch_size, use_logits,
                    soft_targets, tile, chunk, tiles_per_core):
    """Accumulates class-index moments over batch tiles.

    yp_ref : (C, tile)   predictions, batch on the 128-wide lane axis
    yt_ref : (1, tile)   int32 labels   (one-hot path)  or
             (C, tile)   f32 soft targets (soft path)
    out_ref: (8, 128)    per-core partial-moment row (lanes 0..6 of row 0)
    a_acc  : (C, chunk)  VMEM accumulator of pred_norm
    nom_acc: (C, chunk) or (1, chunk) VMEM accumulator of the numerator terms
    t0/1/2_acc: (1, chunk) VMEM accumulators of the target moments
    """
    core = pl.program_id(0)
    step = pl.program_id(1)
    nsteps = pl.num_programs(1)

    @pl.when(step == 0)
    def _init():
        a_acc[...] = jnp.zeros_like(a_acc)
        nom_acc[...] = jnp.zeros_like(nom_acc)
        t0_acc[...] = jnp.zeros_like(t0_acc)
        t1_acc[...] = jnp.zeros_like(t1_acc)
        t2_acc[...] = jnp.zeros_like(t2_acc)
        out_ref[...] = jnp.zeros_like(out_ref)

    # Constant iotas hoisted out of the chunk loop (JAX does not CSE
    # broadcast_in_dim, so keep a single instance per grid step).
    cls = lax.broadcasted_iota(
        jnp.int32, (num_classes, chunk), 0).astype(jnp.float32)
    lane = lax.broadcasted_iota(jnp.int32, (1, chunk), 1)
    col0 = (core * tiles_per_core + step) * tile   # global column of this tile

    def chunk_body(k, carry):
        off = pl.multiple_of(k * chunk, 128)
        yp = yp_ref[:, pl.ds(off, chunk)].astype(jnp.float32)    # (C, chunk)
        valid = (lane + (col0 + off) < batch_size).astype(jnp.float32)

        if use_logits:
            # Fused softmax over the class (sublane) axis; exp computed once.
            mx = jnp.max(yp, axis=0, keepdims=True)
            e = jnp.exp(yp - mx)
            s = jnp.sum(e, axis=0, keepdims=True)
            yp = e * pl.reciprocal(s, approx=True)

        # pred ** y_pow
        pw = yp * yp if y_pow == 2 else yp

        # pred_norm = pw / (eps + sum_c pw); mask only the thin (1, chunk) inv.
        ssum = jnp.sum(pw, axis=0, keepdims=True)
        inv = pl.reciprocal(epsilon + ssum, approx=True) * valid
        pn = pw * inv                                            # (C, chunk)
        a_acc[...] += pn

        if soft_targets:
            yt = yt_ref[:, pl.ds(off, chunk)].astype(jnp.float32)  # (C, chunk)
            it = cls * yt
            t0 = jnp.sum(yt, axis=0, keepdims=True)
            t1 = jnp.sum(it, axis=0, keepdims=True)
            t2 = jnp.sum(cls * it, axis=0, keepdims=True)
            ip = cls * pn
            p0 = jnp.sum(pn, axis=0, keepdims=True)
            p1 = jnp.sum(ip, axis=0, keepdims=True)
            p2 = jnp.sum(cls * ip, axis=0, keepdims=True)
            nom_acc[...] += p2 * t0 - 2.0 * p1 * t1 + p0 * t2
            t0_acc[...] += t0
            t1_acc[...] += t1
            t2_acc[...] += t2
        else:
            lab = yt_ref[:, pl.ds(off, chunk)].astype(jnp.float32)  # (1, chunk)
            d = cls - lab
            nom_acc[...] += (d * d) * pn          # per-element (i - label)^2
            t0_acc[...] += valid                  # one-hot: t0 == 1 per sample
            t1_acc[...] += lab                    # padded labels are exact 0
            t2_acc[...] += lab * lab
        return carry

    n_chunks = tile // chunk
    lax.fori_loop(0, n_chunks, chunk_body, 0, unroll=min(8, n_chunks))

    @pl.when(step == nsteps - 1)
    def _finish():
        a = a_acc[...]
        ia = cls * a
        nom = jnp.sum(nom_acc[...])
        p0 = jnp.sum(a)
        p1 = jnp.sum(ia)
        p2 = jnp.sum(cls * ia)
        t0 = jnp.sum(t0_acc[...])
        t1 = jnp.sum(t1_acc[...])
        t2 = jnp.sum(t2_acc[...])
        rows = lax.broadcasted_iota(jnp.int32, (8, 128), 0)
        lanes = lax.broadcasted_iota(jnp.int32, (8, 128), 1)

        def put(idx, v):
            return jnp.where((rows == 0) & (lanes == idx), v, 0.0)

        out_ref[...] = (put(0, nom) + put(1, p0) + put(2, p1) + put(3, p2)
                        + put(4, t1) + put(5, t2) + put(6, t0))


@functools.partial(jax.jit, static_argnames=(
    "num_classes", "y_pow", "epsilon", "use_logits", "tile_n", "chunk_n"))
def _wk_loss_impl(y_pred, y_true, *, num_classes, y_pow, epsilon, use_logits,
                  tile_n, chunk_n):
    n, c = y_pred.shape
    assert c == num_classes, (c, num_classes)
    soft = (y_true.ndim != 1)          # float / soft targets: exact moments

    n_cores = 2  # v7x megacore split; runs sequentially (harmless) on v5e/v6e.
    chunk = _round_up(max(128, min(chunk_n, tile_n)), 128)
    tile = _round_up(max(128, min(tile_n, _round_up(max(n, 1), 128))), 128)
    if tile >= chunk:
        tile = _round_up(tile, chunk)
    else:
        chunk = tile
    padded_n = _round_up(max(n, 1), n_cores * tile)
    tiles_per_core = padded_n // (n_cores * tile)
    pad = padded_n - n

    # Lane-dense (C, N) stream.  Transpose + pad + cast fuse into one XLA copy
    # because everything here lives under a single jit.
    # TODO(synk): a copy-free (N, C) feed would need an in-kernel transpose of
    #             a C(=4)-lane-wide block, which lowers poorly; keep the fused
    #             single-copy pre-pass instead.
    yp_t = jnp.pad(jnp.transpose(y_pred, (1, 0)), ((0, 0), (0, pad)))
    if soft:
        yt = jnp.pad(jnp.transpose(y_true.astype(jnp.float32), (1, 0)),
                     ((0, 0), (0, pad)))
        tgt_spec = pl.BlockSpec((num_classes, tile),
                                lambda co, i: (0, co * tiles_per_core + i))
        nom_shape = (1, chunk)
        tgt_bytes = num_classes * tile * 4
    else:
        yt = jnp.pad(y_true.astype(jnp.int32), (0, pad)).reshape(1, padded_n)
        tgt_spec = pl.BlockSpec((1, tile),
                                lambda co, i: (0, co * tiles_per_core + i))
        nom_shape = (num_classes, chunk)
        tgt_bytes = tile * 4

    kernel = functools.partial(
        _wk_loss_kernel,
        num_classes=num_classes, y_pow=y_pow, epsilon=epsilon, batch_size=n,
        use_logits=use_logits, soft_targets=soft, tile=tile, chunk=chunk,
        tiles_per_core=tiles_per_core)

    # Explicit VMEM budget: double-buffered input blocks + accumulators,
    # with headroom; kept well under v7x's 64 MiB per-TensorCore VMEM.
    blk_bytes = num_classes * tile * y_pred.dtype.itemsize + tgt_bytes
    vmem_limit = int(min(64 * 2**20, max(16 * 2**20, 4 * blk_bytes + (2 << 20))))

    out = pl.pallas_call(
        kernel,
        out_shape=jax.ShapeDtypeStruct((8 * n_cores, 128), jnp.float32),
        grid_spec=pltpu.PrefetchScalarGridSpec(
            num_scalar_prefetch=0,
            grid=(n_cores, tiles_per_core),
            in_specs=[
                pl.BlockSpec((num_classes, tile),
                             lambda co, i: (0, co * tiles_per_core + i)),
                tgt_spec,
            ],
            out_specs=pl.BlockSpec((8, 128), lambda co, i: (co, 0)),
            scratch_shapes=[
                pltpu.VMEM((num_classes, chunk), jnp.float32),   # a_acc
                pltpu.VMEM(nom_shape, jnp.float32),              # nom_acc
                pltpu.VMEM((1, chunk), jnp.float32),             # t0_acc
                pltpu.VMEM((1, chunk), jnp.float32),             # t1_acc
                pltpu.VMEM((1, chunk), jnp.float32),             # t2_acc
            ]),
        compiler_params=pltpu.CompilerParams(
            dimension_semantics=("parallel", "arbitrary"),
            vmem_limit_bytes=vmem_limit),
    )(yp_t, yt)

    # Combine the per-core partial-moment rows and finish the ratio (scalar
    # math, negligible).
    m = jnp.sum(out, axis=0)
    nom, p0s, p1s, p2s, t1s, t2s, t0s = (m[0], m[1], m[2], m[3], m[4], m[5],
                                         m[6])
    inv_w = 1.0 / float((num_classes - 1) ** 2)
    denom = (p2s * t0s - 2.0 * p1s * t1s + p0s * t2s) * (inv_w / float(n))
    return (nom * inv_w) / (denom + epsilon)


def wk_loss(y_pred, y_true, *, num_classes, penalization_type="quadratic",
            epsilon=1e-10, use_logits=False, weight=None,
            tile_n=65536, chunk_n=512):
    """Weighted Kappa loss.

    y_pred: (N, C) probabilities (or logits if use_logits=True); f32 or bf16.
    y_true: (N,) integer labels, or (N, C) float (one-hot or soft) targets.
    """
    if penalization_type == "quadratic":
        y_pow = 2
    elif penalization_type == "linear":
        y_pow = 1
    else:
        raise ValueError("penalization_type must be 'linear' or 'quadratic'")
    if weight is not None:
        # TODO(synk): optional per-class `weight` rescaling of the penalty
        # matrix is not implemented in the fused kernel.
        raise NotImplementedError("per-class weight not supported")
    return _wk_loss_impl(
        y_pred, y_true,
        num_classes=int(num_classes), y_pow=int(y_pow),
        epsilon=float(epsilon), use_logits=bool(use_logits),
        tile_n=int(tile_n), chunk_n=int(chunk_n))


def _wk_loss_ref(y_pred, y_true, *, num_classes, y_pow=2, epsilon=1e-10):
    """Pure-JAX reference mirroring the PyTorch forward (probabilities in)."""
    if y_true.ndim == 1:
        y_true = jax.nn.one_hot(y_true, num_classes, dtype=jnp.float32)
    y_true = y_true.astype(jnp.float32)
    y_pred = y_pred.astype(jnp.float32)
    rng = jnp.arange(num_classes, dtype=jnp.float32)
    repeat_op = jnp.tile(rng[:, None], (1, num_classes))
    weights = jnp.square(repeat_op - repeat_op.T) / (num_classes - 1) ** 2
    pred_ = y_pred ** y_pow
    pred_norm = pred_ / (epsilon + jnp.sum(pred_, axis=1, keepdims=True))
    hist_a = jnp.sum(pred_norm, axis=0)
    hist_b = jnp.sum(y_true, axis=0)
    conf_mat = pred_norm.T @ y_true
    bsize = y_pred.shape[0]
    nom = jnp.sum(weights * conf_mat)
    expected = hist_a[:, None] * hist_b[None, :]
    denom = jnp.sum(weights * expected / bsize)
    return nom / (denom + epsilon)


if __name__ == "__main__":
    num_classes = 4
    key = jax.random.PRNGKey(0)
    k1, k2, k3, k4, k5 = jax.random.split(key, 5)

    # Tolerances are relaxed slightly because both reciprocals use the EUP
    # approximate fast path (pl.reciprocal(approx=True)).
    RTOL, ATOL = 1e-2, 1e-5

    # 1) Tiny probability path (quadratic penalization, int labels).
    batch = 8
    logits = jax.random.normal(k1, (batch, num_classes), dtype=jnp.float32)
    probs = jax.nn.softmax(logits, axis=1)
    labels = jax.random.randint(k2, (batch,), 0, num_classes, dtype=jnp.int32)
    loss = wk_loss(probs, labels, num_classes=num_classes,
                   penalization_type="quadratic", use_logits=False)
    loss = jax.block_until_ready(loss)
    ref = _wk_loss_ref(probs, labels, num_classes=num_classes, y_pow=2)
    assert jnp.allclose(loss, ref, rtol=RTOL, atol=ATOL), (loss, ref)

    # 2) Logits path (fused in-kernel softmax, linear penalization) at a size
    #    that exercises multiple tiles per core, the inner chunk loop, the
    #    dual-core grid split and tail masking.
    batch2 = 600
    logits2 = jax.random.normal(k3, (batch2, num_classes), dtype=jnp.float32)
    labels2 = jax.random.randint(k4, (batch2,), 0, num_classes,
                                 dtype=jnp.int32)
    loss2 = wk_loss(logits2, labels2, num_classes=num_classes,
                    penalization_type="linear", use_logits=True,
                    tile_n=256, chunk_n=128)
    loss2 = jax.block_until_ready(loss2)
    ref2 = _wk_loss_ref(jax.nn.softmax(logits2, axis=1), labels2,
                        num_classes=num_classes, y_pow=1)
    assert jnp.allclose(loss2, ref2, rtol=RTOL, atol=ATOL), (loss2, ref2)

    # 3) Soft float-target path (exact, no argmax fallback).
    y_soft = jax.nn.softmax(
        1.5 * jax.random.normal(k5, (batch, num_classes), dtype=jnp.float32),
        axis=1)
    loss3 = wk_loss(probs, y_soft, num_classes=num_classes,
                    penalization_type="quadratic", use_logits=False)
    loss3 = jax.block_until_ready(loss3)
    ref3 = _wk_loss_ref(probs, y_soft, num_classes=num_classes, y_pow=2)
    assert jnp.allclose(loss3, ref3, rtol=RTOL, atol=ATOL), (loss3, ref3)

    print("KERNEL_OK")
</pallas_src>

<mosaic_0001>
module attributes {stable_mosaic.version = 11 : i64} {
  func.func @_wk_loss_kernel(%arg0: i32, %arg1: i32, %arg2: memref<4x128xf32, #tpu.memory_space<vmem>>, %arg3: memref<1x128xi32, #tpu.memory_space<vmem>>, %arg4: memref<8x128xf32, #tpu.memory_space<vmem>>, %arg5: memref<4x128xf32, #tpu.memory_space<vmem>>, %arg6: memref<4x128xf32, #tpu.memory_space<vmem>>, %arg7: memref<1x128xf32, #tpu.memory_space<vmem>>, %arg8: memref<1x128xf32, #tpu.memory_space<vmem>>, %arg9: memref<1x128xf32, #tpu.memory_space<vmem>>) attributes {dimension_semantics = [#tpu.dimension_semantics<parallel>, #tpu.dimension_semantics<arbitrary>], iteration_bounds = array<i64: 2, 1>, scalar_prefetch = 0 : i64, scratch_operands = 5 : i64, tpu.core_type = #tpu.core_type<tc>, window_params = [{transform_indices = @transform_0, window_bounds = array<i64: 4, 128>}, {transform_indices = @transform_1, window_bounds = array<i64: 1, 128>}, {transform_indices = @transform_2, window_bounds = array<i64: 8, 128>}]} {
    %c0_i32 = arith.constant 0 : i32
    %0 = arith.cmpi eq, %arg1, %c0_i32 : i32
    %1 = arith.extui %0 : i1 to i32
    %c0_i32_0 = arith.constant 0 : i32
    %2 = arith.cmpi ne, %1, %c0_i32_0 : i32
    scf.if %2 {
      %cst_28 = arith.constant 0.000000e+00 : f32
      %55 = vector.broadcast %cst_28 : f32 to vector<4x128xf32>
      %c0_29 = arith.constant 0 : index
      %c0_30 = arith.constant 0 : index
      %56 = vector.load %arg5[%c0_29, %c0_30] : memref<4x128xf32, #tpu.memory_space<vmem>>, vector<4x128xf32>
      tpu.vector_store %arg5[%c0_29, %c0_30], %55 {strides = array<i32>} : memref<4x128xf32, #tpu.memory_space<vmem>>, vector<4x128xf32>,
      %cst_31 = arith.constant 0.000000e+00 : f32
      %57 = vector.broadcast %cst_31 : f32 to vector<4x128xf32>
      %c0_32 = arith.constant 0 : index
      %c0_33 = arith.constant 0 : index
      %58 = vector.load %arg6[%c0_32, %c0_33] : memref<4x128xf32, #tpu.memory_space<vmem>>, vector<4x128xf32>
      tpu.vector_store %arg6[%c0_32, %c0_33], %57 {strides = array<i32>} : memref<4x128xf32, #tpu.memory_space<vmem>>, vector<4x128xf32>,
      %cst_34 = arith.constant 0.000000e+00 : f32
      %59 = vector.broadcast %cst_34 : f32 to vector<1x128xf32>
      %c0_35 = arith.constant 0 : index
      %c0_36 = arith.constant 0 : index
      %60 = vector.load %arg7[%c0_35, %c0_36] : memref<1x128xf32, #tpu.memory_space<vmem>>, vector<1x128xf32>
      tpu.vector_store %arg7[%c0_35, %c0_36], %59 {strides = array<i32>} : memref<1x128xf32, #tpu.memory_space<vmem>>, vector<1x128xf32>,
      %cst_37 = arith.constant 0.000000e+00 : f32
      %61 = vector.broadcast %cst_37 : f32 to vector<1x128xf32>
      %c0_38 = arith.constant 0 : index
      %c0_39 = arith.constant 0 : index
      %62 = vector.load %arg8[%c0_38, %c0_39] : memref<1x128xf32, #tpu.memory_space<vmem>>, vector<1x128xf32>
      tpu.vector_store %arg8[%c0_38, %c0_39], %61 {strides = array<i32>} : memref<1x128xf32, #tpu.memory_space<vmem>>, vector<1x128xf32>,
      %cst_40 = arith.constant 0.000000e+00 : f32
      %63 = vector.broadcast %cst_40 : f32 to vector<1x128xf32>
      %c0_41 = arith.constant 0 : index
      %c0_42 = arith.constant 0 : index
      %64 = vector.load %arg9[%c0_41, %c0_42] : memref<1x128xf32, #tpu.memory_space<vmem>>, vector<1x128xf32>
      tpu.vector_store %arg9[%c0_41, %c0_42], %63 {strides = array<i32>} : memref<1x128xf32, #tpu.memory_space<vmem>>, vector<1x128xf32>,
      %cst_43 = arith.constant 0.000000e+00 : f32
      %65 = vector.broadcast %cst_43 : f32 to vector<8x128xf32>
      %c0_44 = arith.constant 0 : index
      %c0_45 = arith.constant 0 : index
      %66 = vector.load %arg4[%c0_44, %c0_45] : memref<8x128xf32, #tpu.memory_space<vmem>>, vector<8x128xf32>
      tpu.vector_store %arg4[%c0_44, %c0_45], %65 {strides = array<i32>} : memref<8x128xf32, #tpu.memory_space<vmem>>, vector<8x128xf32>,
    } else {
    }
    %3 = tpu.iota {dimensions = array<i32: 0>} : vector<4x128xi32>
    %4 = arith.sitofp %3 : vector<4x128xi32> to vector<4x128xf32>
    %5 = tpu.iota {dimensions = array<i32: 1>} : vector<1x128xi32>
    %c1_i32 = arith.constant 1 : i32
    %6 = arith.muli %arg0, %c1_i32 : i32
    %7 = arith.addi %6, %arg1 : i32
    %c128_i32 = arith.constant 128 : i32
    %8 = arith.muli %7, %c128_i32 : i32
    %c0_i32_1 = arith.constant 0 : i32
    %c128_i32_2 = arith.constant 128 : i32
    %9 = arith.muli %c0_i32_1, %c128_i32_2 : i32
    %10 = tpu.assume_multiple %9, 128 : i32
    %c0 = arith.constant 0 : index
    %11 = arith.index_cast %10 : i32 to index
    %12 = vector.load %arg2[%c0, %11] : memref<4x128xf32, #tpu.memory_space<vmem>>, vector<4x128xf32>
    %13 = arith.addi %8, %10 : i32
    %14 = vector.broadcast %13 : i32 to vector<1x128xi32>
    %15 = arith.addi %5, %14 : vector<1x128xi32>
    %c8_i32 = arith.constant 8 : i32
    %16 = vector.broadcast %c8_i32 : i32 to vector<1x128xi32>
    %17 = arith.cmpi slt, %15, %16 : vector<1x128xi32>
    %18 = arith.extui %17 : vector<1x128xi1> to vector<1x128xi32>
    %19 = arith.sitofp %18 : vector<1x128xi32> to vector<1x128xf32>
    %20 = arith.mulf %12, %12 : vector<4x128xf32>
    %cst = arith.constant dense<0.000000e+00> : vector<128xf32>
    %21 = vector.multi_reduction <add>, %20, %cst [0] : vector<4x128xf32> to vector<128xf32>
    %22 = vector.shape_cast %21 : vector<128xf32> to vector<1x128xf32>
    %cst_3 = arith.constant 1.000000e-10 : f32
    %23 = vector.broadcast %cst_3 : f32 to vector<1x128xf32>
    %24 = arith.addf %23, %22 : vector<1x128xf32>
    %25 = tpu.reciprocal %24 {approx = true} : vector<1x128xf32> -> vector<1x128xf32>
    %26 = arith.mulf %25, %19 : vector<1x128xf32>
    %27 = vector.broadcast %26 : vector<1x128xf32> to vector<4x128xf32>
    %28 = arith.mulf %20, %27 : vector<4x128xf32>
    %c0_4 = arith.constant 0 : index
    %c0_5 = arith.constant 0 : index
    %29 = vector.load %arg5[%c0_4, %c0_5] : memref<4x128xf32, #tpu.memory_space<vmem>>, vector<4x128xf32>
    %30 = arith.addf %29, %28 : vector<4x128xf32>
    %c0_6 = arith.constant 0 : index
    %c0_7 = arith.constant 0 : index
    %31 = vector.load %arg5[%c0_6, %c0_7] : memref<4x128xf32, #tpu.memory_space<vmem>>, vector<4x128xf32>
    tpu.vector_store %arg5[%c0_6, %c0_7], %30 {strides = array<i32>} : memref<4x128xf32, #tpu.memory_space<vmem>>, vector<4x128xf32>,
    %c0_8 = arith.constant 0 : index
    %32 = arith.index_cast %10 : i32 to index
    %33 = vector.load %arg3[%c0_8, %32] : memref<1x128xi32, #tpu.memory_space<vmem>>, vector<1x128xi32>
    %34 = arith.sitofp %33 : vector<1x128xi32> to vector<1x128xf32>
    %35 = vector.broadcast %34 : vector<1x128xf32> to vector<4x128xf32>
    %36 = arith.subf %4, %35 : vector<4x128xf32>
    %c0_9 = arith.constant 0 : index
    %c0_10 = arith.constant 0 : index
    %37 = vector.load %arg6[%c0_9, %c0_10] : memref<4x128xf32, #tpu.memory_space<vmem>>, vector<4x128xf32>
    %38 = arith.mulf %36, %36 : vector<4x128xf32>
    %39 = arith.mulf %38, %28 : vector<4x128xf32>
    %40 = arith.addf %37, %39 : vector<4x128xf32>
    %c0_11 = arith.constant 0 : index
    %c0_12 = arith.constant 0 : index
    %41 = vector.load %arg6[%c0_11, %c0_12] : memref<4x128xf32, #tpu.memory_space<vmem>>, vector<4x128xf32>
    tpu.vector_store %arg6[%c0_11, %c0_12], %40 {strides = array<i32>} : memref<4x128xf32, #tpu.memory_space<vmem>>, vector<4x128xf32>,
    %c0_13 = arith.constant 0 : index
    %c0_14 = arith.constant 0 : index
    %42 = vector.load %arg7[%c0_13, %c0_14] : memref<1x128xf32, #tpu.memory_space<vmem>>, vector<1x128xf32>
    %43 = arith.addf %42, %19 : vector<1x128xf32>
    %c0_15 = arith.constant 0 : index
    %c0_16 = arith.constant 0 : index
    %44 = vector.load %arg7[%c0_15, %c0_16] : memref<1x128xf32, #tpu.memory_space<vmem>>, vector<1x128xf32>
    tpu.vector_store %arg7[%c0_15, %c0_16], %43 {strides = array<i32>} : memref<1x128xf32, #tpu.memory_space<vmem>>, vector<1x128xf32>,
    %c0_17 = arith.constant 0 : index
    %c0_18 = arith.constant 0 : index
    %45 = vector.load %arg8[%c0_17, %c0_18] : memref<1x128xf32, #tpu.memory_space<vmem>>, vector<1x128xf32>
    %46 = arith.addf %45, %34 : vector<1x128xf32>
    %c0_19 = arith.constant 0 : index
    %c0_20 = arith.constant 0 : index
    %47 = vector.load %arg8[%c0_19, %c0_20] : memref<1x128xf32, #tpu.memory_space<vmem>>, vector<1x128xf32>
    tpu.vector_store %arg8[%c0_19, %c0_20], %46 {strides = array<i32>} : memref<1x128xf32, #tpu.memory_space<vmem>>, vector<1x128xf32>,
    %c0_21 = arith.constant 0 : index
    %c0_22 = arith.constant 0 : index
    %48 = vector.load %arg9[%c0_21, %c0_22] : memref<1x128xf32, #tpu.memory_space<vmem>>, vector<1x128xf32>
    %49 = arith.mulf %34, %34 : vector<1x128xf32>
    %50 = arith.addf %48, %49 : vector<1x128xf32>
    %c0_23 = arith.constant 0 : index
    %c0_24 = arith.constant 0 : index
    %51 = vector.load %arg9[%c0_23, %c0_24] : memref<1x128xf32, #tpu.memory_space<vmem>>, vector<1x128xf32>
    tpu.vector_store %arg9[%c0_23, %c0_24], %50 {strides = array<i32>} : memref<1x128xf32, #tpu.memory_space<vmem>>, vector<1x128xf32>,
    %c1_i32_25 = arith.constant 1 : i32
    %c0_i32_26 = arith.constant 0 : i32
    %52 = arith.cmpi eq, %arg1, %c0_i32_26 : i32
    %53 = arith.extui %52 : i1 to i32
    %c0_i32_27 = arith.constant 0 : i32
    %54 = arith.cmpi ne, %53, %c0_i32_27 : i32
    scf.if %54 {
      %c0_28 = arith.constant 0 : index
      %c0_29 = arith.constant 0 : index
      %55 = vector.load %arg5[%c0_28, %c0_29] : memref<4x128xf32, #tpu.memory_space<vmem>>, vector<4x128xf32>
      %56 = arith.mulf %4, %55 : vector<4x128xf32>
      %c0_30 = arith.constant 0 : index
      %c0_31 = arith.constant 0 : index
      %57 = vector.load %arg6[%c0_30, %c0_31] : memref<4x128xf32, #tpu.memory_space<vmem>>, vector<4x128xf32>
      %58 = vector.shape_cast %57 : vector<4x128xf32> to vector<1x4x128xf32>
      %cst_32 = arith.constant dense<0.000000e+00> : vector<1xf32>
      %59 = vector.multi_reduction <add>, %58, %cst_32 [1, 2] : vector<1x4x128xf32> to vector<1xf32>
      %60 = vector.shape_cast %59 : vector<1xf32> to vector<1x1x1xf32>
      %61 = vector.extract %60[0, 0, 0] : f32 from vector<1x1x1xf32>
      %62 = vector.shape_cast %55 : vector<4x128xf32> to vector<1x4x128xf32>
      %cst_33 = arith.constant dense<0.000000e+00> : vector<1xf32>
      %63 = vector.multi_reduction <add>, %62, %cst_33 [1, 2] : vector<1x4x128xf32> to vector<1xf32>
      %64 = vector.shape_cast %63 : vector<1xf32> to vector<1x1x1xf32>
      %65 = vector.extract %64[0, 0, 0] : f32 from vector<1x1x1xf32>
      %66 = vector.shape_cast %56 : vector<4x128xf32> to vector<1x4x128xf32>
      %cst_34 = arith.constant dense<0.000000e+00> : vector<1xf32>
      %67 = vector.multi_reduction <add>, %66, %cst_34 [1, 2] : vector<1x4x128xf32> to vector<1xf32>
      %68 = vector.shape_cast %67 : vector<1xf32> to vector<1x1x1xf32>
      %69 = vector.extract %68[0, 0, 0] : f32 from vector<1x1x1xf32>
      %70 = arith.mulf %4, %56 : vector<4x128xf32>
      %71 = vector.shape_cast %70 : vector<4x128xf32> to vector<1x4x128xf32>
      %cst_35 = arith.constant dense<0.000000e+00> : vector<1xf32>
      %72 = vector.multi_reduction <add>, %71, %cst_35 [1, 2] : vector<1x4x128xf32> to vector<1xf32>
      %73 = vector.shape_cast %72 : vector<1xf32> to vector<1x1x1xf32>
      %74 = vector.extract %73[0, 0, 0] : f32 from vector<1x1x1xf32>
      %c0_36 = arith.constant 0 : index
      %c0_37 = arith.constant 0 : index
      %75 = vector.load %arg7[%c0_36, %c0_37] : memref<1x128xf32, #tpu.memory_space<vmem>>, vector<1x128xf32>
      %76 = vector.shape_cast %75 : vector<1x128xf32> to vector<1x1x128xf32>
      %cst_38 = arith.constant dense<0.000000e+00> : vector<1xf32>
      %77 = vector.multi_reduction <add>, %76, %cst_38 [1, 2] : vector<1x1x128xf32> to vector<1xf32>
      %78 = vector.shape_cast %77 : vector<1xf32> to vector<1x1x1xf32>
      %79 = vector.extract %78[0, 0, 0] : f32 from vector<1x1x1xf32>
      %c0_39 = arith.constant 0 : index
      %c0_40 = arith.constant 0 : index
      %80 = vector.load %arg8[%c0_39, %c0_40] : memref<1x128xf32, #tpu.memory_space<vmem>>, vector<1x128xf32>
      %81 = vector.shape_cast %80 : vector<1x128xf32> to vector<1x1x128xf32>
      %cst_41 = arith.constant dense<0.000000e+00> : vector<1xf32>
      %82 = vector.multi_reduction <add>, %81, %cst_41 [1, 2] : vector<1x1x128xf32> to vector<1xf32>
      %83 = vector.shape_cast %82 : vector<1xf32> to vector<1x1x1xf32>
      %84 = vector.extract %83[0, 0, 0] : f32 from vector<1x1x1xf32>
      %c0_42 = arith.constant 0 : index
      %c0_43 = arith.constant 0 : index
      %85 = vector.load %arg9[%c0_42, %c0_43] : memref<1x128xf32, #tpu.memory_space<vmem>>, vector<1x128xf32>
      %86 = vector.shape_cast %85 : vector<1x128xf32> to vector<1x1x128xf32>
      %cst_44 = arith.constant dense<0.000000e+00> : vector<1xf32>
      %87 = vector.multi_reduction <add>, %86, %cst_44 [1, 2] : vector<1x1x128xf32> to vector<1xf32>
      %88 = vector.shape_cast %87 : vector<1xf32> to vector<1x1x1xf32>
      %89 = vector.extract %88[0, 0, 0] : f32 from vector<1x1x1xf32>
      %90 = tpu.iota {dimensions = array<i32: 0>} : vector<8x128xi32>
      %91 = tpu.iota {dimensions = array<i32: 1>} : vector<8x128xi32>
      %c0_i32_45 = arith.constant 0 : i32
      %92 = vector.broadcast %c0_i32_45 : i32 to vector<8x128xi32>
      %93 = arith.cmpi eq, %90, %92 : vector<8x128xi32>
      %c0_i32_46 = arith.constant 0 : i32
      %94 = vector.broadcast %c0_i32_46 : i32 to vector<8x128xi32>
      %95 = arith.cmpi eq, %91, %94 : vector<8x128xi32>
      %96 = arith.andi %93, %95 : vector<8x128xi1>
      %cst_47 = arith.constant 0.000000e+00 : f32
      %97 = vector.broadcast %61 : f32 to vector<8x128xf32>
      %98 = vector.broadcast %cst_47 : f32 to vector<8x128xf32>
      %99 = arith.select %96, %97, %98 : vector<8x128xi1>, vector<8x128xf32>
      %c0_i32_48 = arith.constant 0 : i32
      %100 = vector.broadcast %c0_i32_48 : i32 to vector<8x128xi32>
      %101 = arith.cmpi eq, %90, %100 : vector<8x128xi32>
      %c1_i32_49 = arith.constant 1 : i32
      %102 = vector.broadcast %c1_i32_49 : i32 to vector<8x128xi32>
      %103 = arith.cmpi eq, %91, %102 : vector<8x128xi32>
      %104 = arith.andi %101, %103 : vector<8x128xi1>
      %cst_50 = arith.constant 0.000000e+00 : f32
      %105 = vector.broadcast %65 : f32 to vector<8x128xf32>
      %106 = vector.broadcast %cst_50 : f32 to vector<8x128xf32>
      %107 = arith.select %104, %105, %106 : vector<8x128xi1>, vector<8x128xf32>
      %108 = arith.addf %99, %107 : vector<8x128xf32>
      %c0_i32_51 = arith.constant 0 : i32
      %109 = vector.broadcast %c0_i32_51 : i32 to vector<8x128xi32>
      %110 = arith.cmpi eq, %90, %109 : vector<8x128xi32>
      %c2_i32 = arith.constant 2 : i32
      %111 = vector.broadcast %c2_i32 : i32 to vector<8x128xi32>
      %112 = arith.cmpi eq, %91, %111 : vector<8x128xi32>
      %113 = arith.andi %110, %112 : vector<8x128xi1>
      %cst_52 = arith.constant 0.000000e+00 : f32
      %114 = vector.broadcast %69 : f32 to vector<8x128xf32>
      %115 = vector.broadcast %cst_52 : f32 to vector<8x128xf32>
      %116 = arith.select %113, %114, %115 : vector<8x128xi1>, vector<8x128xf32>
      %117 = arith.addf %108, %116 : vector<8x128xf32>
      %c0_i32_53 = arith.constant 0 : i32
      %118 = vector.broadcast %c0_i32_53 : i32 to vector<8x128xi32>
      %119 = arith.cmpi eq, %90, %118 : vector<8x128xi32>
      %c3_i32 = arith.constant 3 : i32
      %120 = vector.broadcast %c3_i32 : i32 to vector<8x128xi32>
      %121 = arith.cmpi eq, %91, %120 : vector<8x128xi32>
      %122 = arith.andi %119, %121 : vector<8x128xi1>
      %cst_54 = arith.constant 0.000000e+00 : f32
      %123 = vector.broadcast %74 : f32 to vector<8x128xf32>
      %124 = vector.broadcast %cst_54 : f32 to vector<8x128xf32>
      %125 = arith.select %122, %123, %124 : vector<8x128xi1>, vector<8x128xf32>
      %126 = arith.addf %117, %125 : vector<8x128xf32>
      %c0_i32_55 = arith.constant 0 : i32
      %127 = vector.broadcast %c0_i32_55 : i32 to vector<8x128xi32>
      %128 = arith.cmpi eq, %90, %127 : vector<8x128xi32>
      %c4_i32 = arith.constant 4 : i32
      %129 = vector.broadcast %c4_i32 : i32 to vector<8x128xi32>
      %130 = arith.cmpi eq, %91, %129 : vector<8x128xi32>
      %131 = arith.andi %128, %130 : vector<8x128xi1>
      %cst_56 = arith.constant 0.000000e+00 : f32
      %132 = vector.broadcast %84 : f32 to vector<8x128xf32>
      %133 = vector.broadcast %cst_56 : f32 to vector<8x128xf32>
      %134 = arith.select %131, %132, %133 : vector<8x128xi1>, vector<8x128xf32>
      %135 = arith.addf %126, %134 : vector<8x128xf32>
      %c0_i32_57 = arith.constant 0 : i32
      %136 = vector.broadcast %c0_i32_57 : i32 to vector<8x128xi32>
      %137 = arith.cmpi eq, %90, %136 : vector<8x128xi32>
      %c5_i32 = arith.constant 5 : i32
      %138 = vector.broadcast %c5_i32 : i32 to vector<8x128xi32>
      %139 = arith.cmpi eq, %91, %138 : vector<8x128xi32>
      %140 = arith.andi %137, %139 : vector<8x128xi1>
      %cst_58 = arith.constant 0.000000e+00 : f32
      %141 = vector.broadcast %89 : f32 to vector<8x128xf32>
      %142 = vector.broadcast %cst_58 : f32 to vector<8x128xf32>
      %143 = arith.select %140, %141, %142 : vector<8x128xi1>, vector<8x128xf32>
      %144 = arith.addf %135, %143 : vector<8x128xf32>
      %c0_i32_59 = arith.constant 0 : i32
      %145 = vector.broadcast %c0_i32_59 : i32 to vector<8x128xi32>
      %146 = arith.cmpi eq, %90, %145 : vector<8x128xi32>
      %c6_i32 = arith.constant 6 : i32
      %147 = vector.broadcast %c6_i32 : i32 to vector<8x128xi32>
      %148 = arith.cmpi eq, %91, %147 : vector<8x128xi32>
      %149 = arith.andi %146, %148 : vector<8x128xi1>
      %cst_60 = arith.constant 0.000000e+00 : f32
      %150 = vector.broadcast %79 : f32 to vector<8x128xf32>
      %151 = vector.broadcast %cst_60 : f32 to vector<8x128xf32>
      %152 = arith.select %149, %150, %151 : vector<8x128xi1>, vector<8x128xf32>
      %153 = arith.addf %144, %152 : vector<8x128xf32>
      %c0_61 = arith.constant 0 : index
      %c0_62 = arith.constant 0 : index
      %154 = vector.load %arg4[%c0_61, %c0_62] : memref<8x128xf32, #tpu.memory_space<vmem>>, vector<8x128xf32>
      tpu.vector_store %arg4[%c0_61, %c0_62], %153 {strides = array<i32>} : memref<8x128xf32, #tpu.memory_space<vmem>>, vector<8x128xf32>,
    } else {
    }
    return
  }
  func.func @transform_0(%arg0: i32, %arg1: i32) -> (i32, i32) {
    %c1_i32 = arith.constant 1 : i32
    %0 = arith.muli %arg0, %c1_i32 : i32
    %1 = arith.addi %0, %arg1 : i32
    %c0_i32 = arith.constant 0 : i32
    %c0_i32_0 = arith.constant 0 : i32
    return %c0_i32, %1 : i32, i32
  }
  func.func @transform_1(%arg0: i32, %arg1: i32) -> (i32, i32) {
    %c1_i32 = arith.constant 1 : i32
    %0 = arith.muli %arg0, %c1_i32 : i32
    %1 = arith.addi %0, %arg1 : i32
    %c0_i32 = arith.constant 0 : i32
    %c0_i32_0 = arith.constant 0 : i32
    return %c0_i32, %1 : i32, i32
  }
  func.func @transform_2(%arg0: i32, %arg1: i32) -> (i32, i32) {
    %c0_i32 = arith.constant 0 : i32
    %c0_i32_0 = arith.constant 0 : i32
    return %arg0, %c0_i32 : i32, i32
  }
}

</mosaic_0001>

<llo_original>
// kernel: _wk_loss_impl.1
$region0: #{_wk_loss_impl.1}
  #allocation0 [shape = 'u32[]', space=smem, size = 0x4, offset = 0x4, fixed_abs, tag = 'smem constant byte address 0x4 - core index']
  #allocation1 [shape = 'u32[72,128]{1,0:T(1,128)}', space=vmem, size = 0x9000, scoped, tag = 'internal scratch']
  #allocation2 [shape = 'f32[4,128]{1,0:T(4,128)}', space=vmem, size = 0x800, scoped, tag = 'scratch operand']
  #allocation3 [shape = 'f32[4,128]{1,0:T(4,128)}', space=vmem, size = 0x800, scoped, tag = 'scratch operand']
  #allocation4 [shape = 'f32[1,128]{1,0:T(1,128)}', space=vmem, size = 0x200, scoped, tag = 'scratch operand']
  #allocation5 [shape = 'f32[1,128]{1,0:T(1,128)}', space=vmem, size = 0x200, scoped, tag = 'scratch operand']
  #allocation6 [shape = 'f32[1,128]{1,0:T(1,128)}', space=vmem, size = 0x200, scoped, tag = 'scratch operand']
  %s0 = inlined_call_operand.vmem [shape: f32[4,256], index: 0, kind: input, shape index: {}]
  %s1 = inlined_call_operand.vmem [shape: s32[1,256], index: 1, kind: input, shape index: {}]
  %s2 = inlined_call_operand.vmem [shape: f32[16,128], index: 2, kind: output, shape index: {}]
  %s3 = sld [smem:[#allocation0]]
  $region49: #{_wk_loss_impl.1} parent=0
    _
  %s5 = ssub.s32 1, %s3
  %s6 = scalar_select 0, %s5, %s3
  loop: start=0, step=1, limit=4
  $region2: #{_wk_loss_impl.1} parent=0 // loop_pre_header
    _
  $region3: #{_wk_loss_impl.1} parent=0 // loop_header
    %s8 = sphi 0, %s12
    %p9 = scmp.ge.s32.totalorder %s8, 4
    %s15 = sphi 0, %s27
    %s16 = sphi 0, %s23
    %s17 = sphi 0, %s15
    %s18 = sphi 0, %s16
    %s19 = sphi 0, %s17
    %s20 = sphi 0, %s18
    %s32 = sphi 0, %s34
    %s35 = sphi 0, %s32
    %s36 = sphi 0, %s35
    %s52 = sphi 0, %s36
    %s60 = sphi 0, %s62
    %s63 = sphi 0, %s60
    %s64 = sphi 0, %s63
    %s80 = sphi 0, %s64
    %s86 = sphi 0, %s88
    %s89 = sphi 0, %s86
    %s90 = sphi 0, %s89
    %s106 = sphi 0, %s90
  $region4: #{_wk_loss_impl.1} parent=0 // loop_header_branch
    %11 = sbr.rel (%p9) target = $region8
  $region5: #{_wk_loss_impl.1} parent=0 // loop_body
    %s13 = ssub.s32 %s8, 1
    %s14 = ssub.s32 %s8, 2
    %s21 = sadd.s32 1, %s16
    %p22 = scmp.ge.s32.totalorder %s21, 1
    %s23 = scalar_select %p22, 0, %s21
    %s24 = sadd.s32 1, %s15
    %s25 = scalar_select %p22, %s24, %s15
    %p26 = scmp.ge.s32.totalorder %s25, 2
    %s27 = scalar_select %p26, 0, %s25
    %s28 = sadd.s32 %s15, %s16
    %s29 = sadd.s32 %s27, %s23
    %s30 = ssub.s32 %s28, %s29
    %p31 = scmp.eq.s32.totalorder %s30, 0
    %s33 = sadd.s32 %s32, 1
    %s34 = scalar_select %p31, %s32, %s33
    %p37 = pneg %p31
    %p38 = scmp.eq.s32.totalorder %s8, 1
    %p39 = por %p37, %p38
    %p40 = scmp.ne.s32.totalorder %s32, %s35
    %p41 = scmp.eq.s32.totalorder %s8, 0
    %p42 = por %p40, %p41
    %p43 = scmp.ne.s32.totalorder %s32, %s35
    %p44 = scmp.eq.s32.totalorder %s13, 1
    %p45 = por %p43, %p44
    %p46 = scmp.ne.s32.totalorder %s35, %s36
    %p47 = scmp.eq.s32.totalorder %s13, 0
    %p48 = por %p46, %p47
    %p49 = scmp.ne.s32.totalorder %s35, %s36
    %p50 = scmp.eq.s32.totalorder %s14, 1
    %p51 = por %p49, %p50
    %p53 = scmp.ne.s32.totalorder %s36, %s52
    %p54 = scmp.eq.s32.totalorder %s14, 0
    %p55 = por %p53, %p54
    %s56 = sadd.s32 %s15, %s16
    %s57 = sadd.s32 %s27, %s23
    %s58 = ssub.s32 %s56, %s57
    %p59 = scmp.eq.s32.totalorder %s58, 0
    %s61 = sadd.s32 %s60, 1
    %s62 = scalar_select %p59, %s60, %s61
    %p65 = pneg %p59
    %p66 = scmp.eq.s32.totalorder %s8, 1
    %p67 = por %p65, %p66
    %p68 = scmp.ne.s32.totalorder %s60, %s63
    %p69 = scmp.eq.s32.totalorder %s8, 0
    %p70 = por %p68, %p69
    %p71 = scmp.ne.s32.totalorder %s60, %s63
    %p72 = scmp.eq.s32.totalorder %s13, 1
    %p73 = por %p71, %p72
    %p74 = scmp.ne.s32.totalorder %s63, %s64
    %p75 = scmp.eq.s32.totalorder %s13, 0
    %p76 = por %p74, %p75
    %p77 = scmp.ne.s32.totalorder %s63, %s64
    %p78 = scmp.eq.s32.totalorder %s14, 1
    %p79 = por %p77, %p78
    %p81 = scmp.ne.s32.totalorder %s64, %s80
    %p82 = scmp.eq.s32.totalorder %s14, 0
    %p83 = por %p81, %p82
    %s84 = ssub.s32 %s15, %s27
    %p85 = scmp.eq.s32.totalorder %s84, 0
    %s87 = sadd.s32 %s86, 1
    %s88 = scalar_select %p85, %s86, %s87
    %p91 = pneg %p85
    %p92 = scmp.eq.s32.totalorder %s8, 1
    %p93 = por %p91, %p92
    %p94 = scmp.ne.s32.totalorder %s86, %s89
    %p95 = scmp.eq.s32.totalorder %s8, 0
    %p96 = por %p94, %p95
    %p97 = scmp.ne.s32.totalorder %s86, %s89
    %p98 = scmp.eq.s32.totalorder %s13, 1
    %p99 = por %p97, %p98
    %p100 = scmp.ne.s32.totalorder %s89, %s90
    %p101 = scmp.eq.s32.totalorder %s13, 0
    %p102 = por %p100, %p101
    %p103 = scmp.ne.s32.totalorder %s89, %s90
    %p104 = scmp.eq.s32.totalorder %s14, 1
    %p105 = por %p103, %p104
    %p107 = scmp.ne.s32.totalorder %s90, %s106
    %p108 = scmp.eq.s32.totalorder %s14, 0
    %p109 = por %p107, %p108
    %p110 = scmp.le.s32.totalorder 1, %s8
    %p111 = scmp.lt.s32.totalorder %s8, 3
    %p112 = pnand %p110, %p111
    %p113 = pneg %p112
    // Predicated region
    $region9: #{_wk_loss_impl.1} parent=5 // pred_check
      _
    $region10: #{_wk_loss_impl.1} parent=5 // pred_check_branch
      %115 = sbr.rel (%p112) target = $region12
    $region11: #{_wk_loss_impl.1} parent=5 // pred_region
      %s116 = ssub.s32 %s8, 1
    $region12: #{_wk_loss_impl.1} parent=5 // pred_fallthru
      _
    %p117 = scmp.lt.s32.totalorder %s8, 2
    // Predicated region
    $region13: #{_wk_loss_impl.1} parent=5 // pred_check
      %p118 = pneg %p117
    $region14: #{_wk_loss_impl.1} parent=5 // pred_check_branch
      %120 = sbr.rel (%p118) target = $region16
    $region15: #{_wk_loss_impl.1} parent=5 // pred_region
      // Predicated region
      $region17: #{_wk_loss_impl.1} parent=15 // pred_check
        %p121 = pneg %p42
      $region18: #{_wk_loss_impl.1} parent=15 // pred_check_branch
        %123 = sbr.rel (%p121) target = $region20
      $region19: #{_wk_loss_impl.1} parent=15 // pred_region
        %s124 = sadd.s32 %s15, %s16
        %p125 = scmp.lt.s32.totalorder %s124, 1
        %s126 = scalar_select %p125, %s124, 1
        %s127 = smul.addr %s126, 4
        %s128 = scalar_lea.vmem %s0, %s127
        %s129 = sadd.s32 %s15, %s16
      $region20: #{_wk_loss_impl.1} parent=15 // pred_fallthru
        _
      // Predicated region
      $region21: #{_wk_loss_impl.1} parent=15 // pred_check
        %p130 = pneg %p70
      $region22: #{_wk_loss_impl.1} parent=15 // pred_check_branch
        %132 = sbr.rel (%p130) target = $region24
      $region23: #{_wk_loss_impl.1} parent=15 // pred_region
        %s133 = sadd.s32 %s15, %s16
        %p134 = scmp.lt.s32.totalorder %s133, 1
        %s135 = scalar_select %p134, %s133, 1
        %s136 = scalar_lea.vmem %s1, %s135
        %s137 = sadd.s32 %s15, %s16
      $region24: #{_wk_loss_impl.1} parent=15 // pred_fallthru
        _
    $region16: #{_wk_loss_impl.1} parent=5 // pred_fallthru
      _
    %p138 = scmp.le.s32.totalorder 1, %s8
    %p139 = scmp.lt.s32.totalorder %s8, 3
    %p140 = pnand %p138, %p139
    %p141 = pneg %p140
    // Predicated region
    $region25: #{_wk_loss_impl.1} parent=5 // pred_check
      _
    $region26: #{_wk_loss_impl.1} parent=5 // pred_check_branch
      %143 = sbr.rel (%p140) target = $region28
    $region27: #{_wk_loss_impl.1} parent=5 // pred_region
      %s144 = ssub.s32 %s8, 1
      %s145 = sadd.s32 %s17, %s18
      %p146 = scmp.lt.s32.totalorder %s145, 1
      %s147 = scalar_select %p146, %s145, 1
      %s148 = smul.addr %s147, 4
      %s149 = scalar_lea.vmem %s0, %s148
      %p150 = pneg %p48
      %p151 = pneg %p45
      %s152 = sadd.s32 %s17, %s18
      %p153 = scmp.lt.s32.totalorder %s152, 1
      %s154 = scalar_select %p153, %s152, 1
      %s155 = scalar_lea.vmem %s1, %s154
      %p156 = pneg %p76
      %p157 = pneg %p73
      %p158 = pneg %p102
      %p159 = pneg %p99
      %p160 = scmp.lt.s32.totalorder %s17, 1
      %s161 = scalar_select %p160, %s17, 1
      %s162 = smul.addr %s161, 8
      %s163 = scalar_lea.vmem %s2, %s162
      %s164 = sadd.s32 %s17, %s18
      %p165 = scmp.lt.s32.totalorder %s164, 1
      %s166 = scalar_select %p165, %s164, 1
      %s167 = smul.addr %s166, 4
      %s168 = scalar_lea.vmem %s0, %s167
      %s169 = sadd.s32 %s17, %s18
      %s170 = sadd.s32 %s17, %s18
      %p171 = scmp.lt.s32.totalorder %s170, 1
      %s172 = scalar_select %p171, %s170, 1
      %s173 = scalar_lea.vmem %s1, %s172
      %s174 = sadd.s32 %s17, %s18
      %p175 = scmp.lt.s32.totalorder %s17, 1
      %s176 = scalar_select %p175, %s17, 1
      %s177 = smul.addr %s176, 8
      %s178 = scalar_lea.vmem %s2, %s177
      %p179 = scmp.eq.s32.totalorder %s18, 0
      // Predicated region
      $region29: #{_wk_loss_impl.1} parent=27 // pred_check
        %p180 = pneg %p179
      $region30: #{_wk_loss_impl.1} parent=27 // pred_check_branch
        %182 = sbr.rel (%p180) target = $region32
      $region31: #{_wk_loss_impl.1} parent=27 // pred_region
        %183 = vst [vmem:[#allocation2] sm:$0xf] 0.0
        %184 = vst [vmem:[#allocation3] sm:$0xf] 0.0
        %185 = vst [vmem:[#allocation4] sm:$0x1] 0.0
        %186 = vst [vmem:[#allocation5] sm:$0x1] 0.0
        %187 = vst [vmem:[#allocation6] sm:$0x1] 0.0
        %188 = vst [vmem:[%s178] sm:$0xff] 0.0
      $region32: #{_wk_loss_impl.1} parent=27 // pred_fallthru
        _
      %v189 = vlaneseq
      %v190 = vshrl.u32 %v189, 7
      %v191 = vcvt.s32.f32 %v190
      %v192 = vlaneseq
      %v193 = vand.u32 %v192, 127
      %s194 = sadd.s32 %s17, %s18
      %s195 = smul.u32 %s194, 128
      %v196 = vld [vmem:[%s168] sm:$0xf]
      %s197 = sadd.s32 %s195, 0
      %v198 = vstv %s197
      %v199 = vadd.s32 %v193, %v198
      %vm200 = vcmp.lt.s32.totalorder %v199, 8
      %v201 = vsel %vm200, 1, 0
      %v202 = vcvt.s32.f32 %v201
      %v203 = vmul.f32 %v196, %v196
      %vm204 = vcmask 1043456
      %v205 = vsel %vm204, %v203, 0.0
      %v206 = vrot.slane %v205, 4
      %v207 = vadd.f32 %v205, %v206
      %v208 = vrot.slane %v207, 2
      %v209 = vadd.f32 %v207, %v208
      %v210 = vrot.slane %v209, 1
      %v211 = vadd.f32 %v209, %v210
      %v212 = vadd.f32 %v211, 1e-10
      %v213 = vrcp.pop %v212
      %v214 = vmul.f32 %v213, %v202
      %v215 = vmul.f32 %v203, %v214
      %v216 = vld [vmem:[#allocation2] sm:$0xf]
      %v217 = vadd.f32 %v216, %v215
      %218 = vst [vmem:[#allocation2] sm:$0xf] %v217
      %v219 = vld [vmem:[%s173] sm:$0x1]
      %v220 = vcvt.s32.f32 %v219
      %v222 = vperm.slane %v220, 0
      %v224 = vsub.f32 %v191, %v222
      %v225 = vld [vmem:[#allocation3] sm:$0xf]
      %v226 = vmul.f32 %v224, %v224
      %v227 = vmul.f32 %v226, %v215
      %v228 = vadd.f32 %v225, %v227
      %229 = vst [vmem:[#allocation3] sm:$0xf] %v228
      %v230 = vld [vmem:[#allocation4] sm:$0x1]
      %v231 = vadd.f32 %v230, %v202
      %232 = vst [vmem:[#allocation4] sm:$0x1] %v231
      %v233 = vld [vmem:[#allocation5] sm:$0x1]
      %v234 = vadd.f32 %v233, %v220
      %235 = vst [vmem:[#allocation5] sm:$0x1] %v234
      %v236 = vld [vmem:[#allocation6] sm:$0x1]
      %v237 = vmul.f32 %v220, %v220
      %v238 = vadd.f32 %v236, %v237
      %239 = vst [vmem:[#allocation6] sm:$0x1] %v238
      // Predicated region
      $region33: #{_wk_loss_impl.1} parent=27 // pred_check
        %p240 = pneg %p179
      $region34: #{_wk_loss_impl.1} parent=27 // pred_check_branch
        %242 = sbr.rel (%p240) target = $region36
      $region35: #{_wk_loss_impl.1} parent=27 // pred_region
        %v243 = vld [vmem:[#allocation2] sm:$0xf]
        %v244 = vmul.f32 %v191, %v243
        %v245 = vld [vmem:[#allocation3] sm:$0xf]
        %v246 = vsel %vm204, %v245, 0.0
        %247 = vadd.xlane.f32.xlu0 %v246
        %v248 = vpop.xlane.xlu0 %247
        %v249 = vrot.slane %v248, 4
        %v250 = vadd.f32 %v248, %v249
        %v251 = vrot.slane %v250, 2
        %v252 = vadd.f32 %v250, %v251
        %v253 = vrot.slane %v252, 1
        %v254 = vadd.f32 %v252, %v253
        %s255 = vtos %v254
        %v256 = vsel %vm204, %v243, 0.0
        %257 = vadd.xlane.f32.xlu0 %v256
        %v258 = vpop.xlane.xlu0 %257
        %v259 = vrot.slane %v258, 4
        %v260 = vadd.f32 %v258, %v259
        %v261 = vrot.slane %v260, 2
        %v262 = vadd.f32 %v260, %v261
        %v263 = vrot.slane %v262, 1
        %v264 = vadd.f32 %v262, %v263
        %s265 = vtos %v264
        %v266 = vsel %vm204, %v244, 0.0
        %267 = vadd.xlane.f32.xlu0 %v266
        %v268 = vpop.xlane.xlu0 %267
        %v269 = vrot.slane %v268, 4
        %v270 = vadd.f32 %v268, %v269
        %v271 = vrot.slane %v270, 2
        %v272 = vadd.f32 %v270, %v271
        %v273 = vrot.slane %v272, 1
        %v274 = vadd.f32 %v272, %v273
        %s275 = vtos %v274
        %v276 = vmul.f32 %v191, %v244
        %v277 = vsel %vm204, %v276, 0.0
        %278 = vadd.xlane.f32.xlu0 %v277
        %v279 = vpop.xlane.xlu0 %278
        %v280 = vrot.slane %v279, 4
        %v281 = vadd.f32 %v279, %v280
        %v282 = vrot.slane %v281, 2
        %v283 = vadd.f32 %v281, %v282
        %v284 = vrot.slane %v283, 1
        %v285 = vadd.f32 %v283, %v284
        %s286 = vtos %v285
        %v287 = vld [vmem:[#allocation4] sm:$0x1]
        %vm288 = vcmask 1040384
        %v289 = vsel %vm288, %v287, 0.0
        %290 = vadd.xlane.f32.xlu0 %v289
        %v291 = vpop.xlane.xlu0 %290
        %v292 = vrot.slane %v291, 4
        %v293 = vadd.f32 %v291, %v292
        %v294 = vrot.slane %v293, 2
        %v295 = vadd.f32 %v293, %v294
        %v296 = vrot.slane %v295, 1
        %v297 = vadd.f32 %v295, %v296
        %s298 = vtos %v297
        %v299 = vld [vmem:[#allocation5] sm:$0x1]
        %v300 = vsel %vm288, %v299, 0.0
        %301 = vadd.xlane.f32.xlu0 %v300
        %v302 = vpop.xlane.xlu0 %301
        %v303 = vrot.slane %v302, 4
        %v304 = vadd.f32 %v302, %v303
        %v305 = vrot.slane %v304, 2
        %v306 = vadd.f32 %v304, %v305
        %v307 = vrot.slane %v306, 1
        %v308 = vadd.f32 %v306, %v307
        %s309 = vtos %v308
        %v310 = vld [vmem:[#allocation6] sm:$0x1]
        %v311 = vsel %vm288, %v310, 0.0
        %312 = vadd.xlane.f32.xlu0 %v311
        %v313 = vpop.xlane.xlu0 %312
        %v314 = vrot.slane %v313, 4
        %v315 = vadd.f32 %v313, %v314
        %v316 = vrot.slane %v315, 2
        %v317 = vadd.f32 %v315, %v316
        %v318 = vrot.slane %v317, 1
        %v319 = vadd.f32 %v317, %v318
        %s320 = vtos %v319
        %vm321 = vcmp.eq.s32.totalorder %v190, 0
        %vm322 = vcmp.eq.s32.totalorder %v193, 0
        %vm323 = vmand %vm321, %vm322
        %v324 = vstv %s255
        %v325 = vsel %vm323, %v324, 0.0
        %vm326 = vcmp.eq.s32.totalorder %v193, 1
        %vm327 = vmand %vm321, %vm326
        %v328 = vstv %s265
        %v329 = vsel %vm327, %v328, 0.0
        %v330 = vadd.f32 %v325, %v329
        %vm331 = vcmp.eq.s32.totalorder %v193, 2
        %vm332 = vmand %vm321, %vm331
        %v333 = vstv %s275
        %v334 = vsel %vm332, %v333, 0.0
        %v335 = vadd.f32 %v330, %v334
        %vm336 = vcmp.eq.s32.totalorder %v193, 3
        %vm337 = vmand %vm321, %vm336
        %v338 = vstv %s286
        %v339 = vsel %vm337, %v338, 0.0
        %v340 = vadd.f32 %v335, %v339
        %vm341 = vcmp.eq.s32.totalorder %v193, 4
        %vm342 = vmand %vm321, %vm341
        %v343 = vstv %s309
        %v344 = vsel %vm342, %v343, 0.0
        %v345 = vadd.f32 %v340, %v344
        %vm346 = vcmp.eq.s32.totalorder %v193, 5
        %vm347 = vmand %vm321, %vm346
        %v348 = vstv %s320
        %v349 = vsel %vm347, %v348, 0.0
        %v350 = vadd.f32 %v345, %v349
        %vm351 = vcmp.eq.s32.totalorder %v193, 6
        %vm352 = vmand %vm321, %vm351
        %v353 = vstv %s298
        %v354 = vsel %vm352, %v353, 0.0
        %v355 = vadd.f32 %v350, %v354
        %356 = vst [vmem:[%s178] sm:$0xff] %v355
      $region36: #{_wk_loss_impl.1} parent=27 // pred_fallthru
        _
      %p357 = scmp.lt.s32.totalorder %s17, 1
      %s358 = scalar_select %p357, %s17, 1
      %s359 = smul.addr %s358, 8
      %s360 = scalar_lea.vmem %s2, %s359
      // Predicated region
      $region37: #{_wk_loss_impl.1} parent=27 // pred_check
        %p361 = pneg %p99
      $region38: #{_wk_loss_impl.1} parent=27 // pred_check_branch
        %363 = sbr.rel (%p361) target = $region40
      $region39: #{_wk_loss_impl.1} parent=27 // pred_region
        _
      $region40: #{_wk_loss_impl.1} parent=27 // pred_fallthru
        _
    $region28: #{_wk_loss_impl.1} parent=5 // pred_fallthru
      _
    %p364 = scmp.le.s32.totalorder 2, %s8
    // Predicated region
    $region41: #{_wk_loss_impl.1} parent=5 // pred_check
      %p365 = pneg %p364
    $region42: #{_wk_loss_impl.1} parent=5 // pred_check_branch
      %367 = sbr.rel (%p365) target = $region44
    $region43: #{_wk_loss_impl.1} parent=5 // pred_region
      %s368 = ssub.s32 %s8, 2
      // Predicated region
      $region45: #{_wk_loss_impl.1} parent=43 // pred_check
        %p369 = pneg %p105
      $region46: #{_wk_loss_impl.1} parent=43 // pred_check_branch
        %371 = sbr.rel (%p369) target = $region48
      $region47: #{_wk_loss_impl.1} parent=43 // pred_region
        %p372 = scmp.lt.s32.totalorder %s19, 1
        %s373 = scalar_select %p372, %s19, 1
        %s374 = smul.addr %s373, 8
        %s375 = scalar_lea.vmem %s2, %s374
      $region48: #{_wk_loss_impl.1} parent=43 // pred_fallthru
        _
    $region44: #{_wk_loss_impl.1} parent=5 // pred_fallthru
      _
  $region6: #{_wk_loss_impl.1} parent=0 // loop_footer
    %s12 = sadd.s32 1, %s8
  $region7: #{_wk_loss_impl.1} parent=0 // loop_footer_branch
    %7 = sbr.rel target = $region3
  $region8: #{_wk_loss_impl.1} parent=0 // loop_exit
    _

</llo_original>
